<compile_context>
chip_gen: v6e
topology: v6e:2x2x1
jax: 0.10.0
libtpu: 0.0.40
codegen_flags: <defaults>
</compile_context>

<pallas_src>
import functools

import jax
import jax.numpy as jnp
from jax.experimental import pallas as pl
from jax.experimental.pallas import tpu as pltpu


def _rmsnorm_kernel(x_ref, w_ref, o_ref, *, eps, inv_h):
    # x_ref: (TILE_ROWS, H) block of hidden_states (input dtype, e.g. bf16)
    # w_ref: (1, H) weight row (broadcast over rows)
    # o_ref: (TILE_ROWS, H) output block (same dtype as input)
    #
    # Read x_ref separately in each expression (no long-lived fp32 tile copy).
    xf = x_ref[...].astype(jnp.float32)
    var = jnp.sum(xf * xf, axis=-1, keepdims=True) * inv_h      # .pow(2).mean(-1)
    inv = jax.lax.rsqrt(var + eps)                              # rsqrt(var + eps)
    # (x * rsqrt) * weight in fp32, single downcast to input dtype (bias=None).
    o_ref[...] = (
        x_ref[...].astype(jnp.float32) * inv * w_ref[...].astype(jnp.float32)
    ).astype(o_ref.dtype)


def _vmem_params():
    """(tile VMEM budget, vmem_limit_bytes) chosen per TPU generation."""
    try:
        info = pltpu.get_tpu_info()
        cap = int(getattr(info, "vmem_capacity_bytes", 64 << 20))
    except Exception:
        cap = 64 << 20  # conservative fallback (v7x-sized VMEM)
    if cap >= (96 << 20):          # v5e / v6e: 128 MiB physical VMEM
        return 40 << 20, 96 << 20
    return 20 << 20, 48 << 20      # v7x: 64 MiB physical VMEM


def _choose_tile_rows(R, H, itemsize, vmem_budget_bytes):
    """Largest row tile (multiple of the dtype sublane pack) fitting the budget."""
    sublane = max(8, 32 // itemsize)            # 8 f32, 16 bf16, 32 int8/fp8

    def _round_down(v):
        return max(sublane, (int(v) // sublane) * sublane)

    def _round_up(v):
        return max(sublane, (-(-int(v) // sublane)) * sublane)

    # Per tile row: double-buffered input + output blocks (itemsize each) plus
    # roughly one streaming fp32 temporary inside the body.
    bytes_per_row = H * (4 * itemsize + 4)
    t = max(1, vmem_budget_bytes // bytes_per_row)
    t = min(t, 2048)                            # diminishing returns beyond ~2k rows
    if R > 2 * sublane:
        t = min(t, -(-R // 2))                  # keep >=2 steps (pipelining, v7x 2 TCs)
    t = min(_round_down(t), _round_up(R))

    # Prefer an even number of grid steps so v7x's two TensorCores split evenly.
    n = -(-R // t)
    if n > 1 and n % 2 == 1:
        t_even = _round_up(-(-R // (n + 1)))
        if (-(-R // t_even)) % 2 == 0:
            t = t_even
    return int(t)


def llmc_llama_rmsnorm(hidden_states, weight, eps=1e-6, tile_rows=None):
    """Pallas RMSNorm. hidden_states: (..., H), weight: (H,)."""
    orig_shape = hidden_states.shape
    H = orig_shape[-1]
    x2d = hidden_states.reshape(-1, H)
    R = x2d.shape[0]
    itemsize = x2d.dtype.itemsize

    vmem_budget, vmem_limit = _vmem_params()
    if tile_rows is None:
        tile_rows = _choose_tile_rows(R, H, itemsize, vmem_budget)

    # No wrapper-side padding: Pallas pads the partial last block's reads and
    # masks its out-of-range output writes. Rows are independent, so the
    # unspecified padded rows cannot contaminate valid rows.
    n_blocks = pl.cdiv(R, tile_rows)

    w2d = weight.reshape(1, H)
    kernel = functools.partial(_rmsnorm_kernel, eps=float(eps), inv_h=1.0 / H)

    cost = pl.CostEstimate(
        flops=4 * R * H,                                   # sq, acc, 2 muls per elem
        transcendentals=R,                                 # one rsqrt per row
        bytes_accessed=2 * R * H * itemsize + H * weight.dtype.itemsize,
    )

    out2d = pl.pallas_call(
        kernel,
        out_shape=jax.ShapeDtypeStruct((R, H), hidden_states.dtype),
        grid_spec=pltpu.PrefetchScalarGridSpec(
            num_scalar_prefetch=0,
            grid=(n_blocks,),
            in_specs=[
                pl.BlockSpec((tile_rows, H), lambda i: (i, 0)),
                pl.BlockSpec((1, H), lambda i: (0, 0)),
            ],
            out_specs=pl.BlockSpec((tile_rows, H), lambda i: (i, 0)),
        ),
        compiler_params=pltpu.CompilerParams(
            dimension_semantics=("parallel",),
            vmem_limit_bytes=vmem_limit,
        ),
        cost_estimate=cost,
    )(x2d, w2d)

    return out2d.reshape(orig_shape)


def _ref_rmsnorm(x, w, eps):
    """Pure-JAX reference matching the PyTorch module's math exactly
    (variance in fp32, weight multiply in fp32, single downcast at the end)."""
    xf = x.astype(jnp.float32)
    var = jnp.mean(xf * xf, axis=-1, keepdims=True)
    h = xf * jax.lax.rsqrt(var + eps)
    return (w.astype(jnp.float32) * h).astype(x.dtype)


if __name__ == "__main__":
    key = jax.random.PRNGKey(0)
    kx, kw, kx2, kx3, kw3 = jax.random.split(key, 5)

    # Small LLM-ish shapes: batch=2, seq=8, hidden=128 (bf16 activations).
    B, S, H = 2, 8, 128
    weight = (1.0 + 0.02 * jax.random.normal(kw, (H,), dtype=jnp.float32)).astype(jnp.bfloat16)
    x = jax.random.normal(kx, (B, S, H), dtype=jnp.float32).astype(jnp.bfloat16)

    out = jax.block_until_ready(llmc_llama_rmsnorm(x, weight, eps=1e-6))
    ref = _ref_rmsnorm(x, weight, 1e-6)
    assert out.shape == x.shape and out.dtype == x.dtype
    assert jnp.allclose(out.astype(jnp.float32), ref.astype(jnp.float32), atol=2e-2, rtol=2e-2)

    # Ragged row count (batch*seq = 15, not a multiple of the 16-row bf16 tile):
    # exercises the unpadded cdiv grid with a masked partial last block.
    B2, S2 = 3, 5
    x_ragged = jax.random.normal(kx2, (B2, S2, H), dtype=jnp.float32).astype(jnp.bfloat16)
    out_r = jax.block_until_ready(llmc_llama_rmsnorm(x_ragged, weight, eps=1e-6))
    ref_r = _ref_rmsnorm(x_ragged, weight, 1e-6)
    assert out_r.shape == x_ragged.shape and out_r.dtype == x_ragged.dtype
    assert jnp.allclose(out_r.astype(jnp.float32), ref_r.astype(jnp.float32), atol=2e-2, rtol=2e-2)

    # f32 activations: exercises the dtype-aware sublane multiple (8) and a
    # ragged row count (14 rows) at a different hidden size.
    H3 = 256
    w3 = 1.0 + 0.02 * jax.random.normal(kw3, (H3,), dtype=jnp.float32)
    x3 = jax.random.normal(kx3, (2, 7, H3), dtype=jnp.float32)
    out3 = jax.block_until_ready(llmc_llama_rmsnorm(x3, w3, eps=1e-6))
    ref3 = _ref_rmsnorm(x3, w3, 1e-6)
    assert out3.shape == x3.shape and out3.dtype == x3.dtype
    assert jnp.allclose(out3, ref3, atol=1e-4, rtol=1e-4)

    print("KERNEL_OK")
</pallas_src>

<mosaic_0001>
module attributes {stable_mosaic.version = 11 : i64} {
  func.func @_rmsnorm_kernel(%arg0: i32, %arg1: memref<16x128xbf16, #tpu.memory_space<vmem>>, %arg2: memref<1x128xbf16, #tpu.memory_space<vmem>>, %arg3: memref<16x128xbf16, #tpu.memory_space<vmem>>) attributes {dimension_semantics = [#tpu.dimension_semantics<parallel>], iteration_bounds = array<i64: 1>, scalar_prefetch = 0 : i64, scratch_operands = 0 : i64, tpu.core_type = #tpu.core_type<tc>, window_params = [{transform_indices = @transform_0, window_bounds = array<i64: 16, 128>}, {pipeline_mode = #tpu.pipeline_mode<synchronous>, transform_indices = @transform_1, window_bounds = array<i64: 1, 128>}, {transform_indices = @transform_2, window_bounds = array<i64: 16, 128>}]} {
    %c0 = arith.constant 0 : index
    %c0_0 = arith.constant 0 : index
    %0 = vector.load %arg1[%c0, %c0_0] : memref<16x128xbf16, #tpu.memory_space<vmem>>, vector<16x128xbf16>
    %1 = arith.extf %0 : vector<16x128xbf16> to vector<16x128xf32>
    %2 = arith.mulf %1, %1 : vector<16x128xf32>
    %cst = arith.constant dense<0.000000e+00> : vector<16xf32>
    %3 = vector.multi_reduction <add>, %2, %cst [1] : vector<16x128xf32> to vector<16xf32>
    %4 = vector.shape_cast %3 : vector<16xf32> to vector<16x1xf32>
    %cst_1 = arith.constant 7.812500e-03 : f32
    %5 = vector.broadcast %cst_1 : f32 to vector<16x1xf32>
    %6 = arith.mulf %4, %5 : vector<16x1xf32>
    %cst_2 = arith.constant 9.99999997E-7 : f32
    %7 = vector.broadcast %cst_2 : f32 to vector<16x1xf32>
    %8 = arith.addf %6, %7 : vector<16x1xf32>
    %9 = math.rsqrt %8 : vector<16x1xf32>
    %c0_3 = arith.constant 0 : index
    %c0_4 = arith.constant 0 : index
    %10 = vector.load %arg1[%c0_3, %c0_4] : memref<16x128xbf16, #tpu.memory_space<vmem>>, vector<16x128xbf16>
    %11 = arith.extf %10 : vector<16x128xbf16> to vector<16x128xf32>
    %12 = vector.broadcast %9 : vector<16x1xf32> to vector<16x128xf32>
    %13 = arith.mulf %11, %12 : vector<16x128xf32>
    %c0_5 = arith.constant 0 : index
    %c0_6 = arith.constant 0 : index
    %14 = vector.load %arg2[%c0_5, %c0_6] : memref<1x128xbf16, #tpu.memory_space<vmem>>, vector<1x128xbf16>
    %15 = arith.extf %14 : vector<1x128xbf16> to vector<1x128xf32>
    %16 = vector.broadcast %15 : vector<1x128xf32> to vector<16x128xf32>
    %17 = arith.mulf %13, %16 : vector<16x128xf32>
    %18 = arith.truncf %17 : vector<16x128xf32> to vector<16x128xbf16>
    %c0_7 = arith.constant 0 : index
    %c0_8 = arith.constant 0 : index
    %19 = vector.load %arg3[%c0_7, %c0_8] : memref<16x128xbf16, #tpu.memory_space<vmem>>, vector<16x128xbf16>
    tpu.vector_store %arg3[%c0_7, %c0_8], %18 {strides = array<i32>} : memref<16x128xbf16, #tpu.memory_space<vmem>>, vector<16x128xbf16>,
    return
  }
  func.func @transform_0(%arg0: i32) -> (i32, i32) {
    %c0_i32 = arith.constant 0 : i32
    %c0_i32_0 = arith.constant 0 : i32
    return %arg0, %c0_i32 : i32, i32
  }
  func.func @transform_1(%arg0: i32) -> (i32, i32) {
    %c0_i32 = arith.constant 0 : i32
    %c0_i32_0 = arith.constant 0 : i32
    %c0_i32_1 = arith.constant 0 : i32
    return %c0_i32, %c0_i32_0 : i32, i32
  }
  func.func @transform_2(%arg0: i32) -> (i32, i32) {
    %c0_i32 = arith.constant 0 : i32
    %c0_i32_0 = arith.constant 0 : i32
    return %arg0, %c0_i32 : i32, i32
  }
}

</mosaic_0001>

<llo_original>
// kernel: tpu_custom_call.1
$region0: #{tpu_custom_call.1}
  #allocation0 [shape = 'u32[]', space=smem, size = 0x4, offset = 0x4, fixed_abs, tag = 'smem constant byte address 0x4 - core index']
  #allocation1 [shape = 'u32[144,128]{1,0:T(1,128)}', space=vmem, size = 0x12000, scoped, tag = 'internal scratch']
  %s0 = inlined_call_operand.hbm [shape: bf16[16,128], index: 0, kind: input, shape index: {}]
  %s1 = inlined_call_operand.vmem [shape: bf16[1,128], index: 1, kind: input, shape index: {}]
  %s2 = inlined_call_operand.hbm [shape: bf16[16,128], index: 2, kind: output, shape index: {}]
  %s3 = sld [smem:[#allocation0]]
  $region22: #{tpu_custom_call.1} parent=0
    _
  %s5 = ssub.s32 1, %s3
  %s6 = scalar_select 0, %s5, %s3
  $region1: #{tpu_custom_call.1} parent=0
    #allocation2 [shape = 'u8[4096]{0}', space=vmem, size = 0x1000, scoped, tag = 'input window, operand 0, single buffered']
    #allocation3 [shape = 's32[1]{0}', space=sflag, size = 0x4, scoped, tag = 'scoped memory for tpu_custom_call.1']
    #allocation4 [shape = 's32[1]{0}', space=sflag, size = 0x4, scoped, tag = 'scoped memory for tpu_custom_call.1']
    #allocation5 [shape = 'u8[4096]{0}', space=vmem, size = 0x1000, scoped, tag = 'output window, operand 0, single buffered']
    %7 = vsyncpa [#allocation3], 0
    %8 = vsyncpa [#allocation4], 0
    // Predicated region
    $region2: #{tpu_custom_call.1} parent=1 // pred_check
      _
    $region3: #{tpu_custom_call.1} parent=1 // pred_check_branch
      %10 = sbr.rel (0) target = $region5
    $region4: #{tpu_custom_call.1} parent=1 // pred_region
      %s12 = ssub.s32 128, 128
      %13 = vsyncadd [#allocation3], %s12
      %s14 = sshll.u32 [#allocation2], 4
      %s15 = int_to_ptr.vmem [resolvable:$true] %s14
      %20 = dma.hbm_to_vmem [thread:$0]  %s0, 128, %s15, [#allocation3], 64, 64, 4
    $region5: #{tpu_custom_call.1} parent=1 // pred_fallthru
      _
    // Predicated region
    $region6: #{tpu_custom_call.1} parent=1 // pred_check
      _
    $region7: #{tpu_custom_call.1} parent=1 // pred_check_branch
      %22 = sbr.rel (0) target = $region9
    $region8: #{tpu_custom_call.1} parent=1 // pred_region
      _
    $region9: #{tpu_custom_call.1} parent=1 // pred_fallthru
      _
    // Predicated region
    $region10: #{tpu_custom_call.1} parent=1 // pred_check
      _
    $region11: #{tpu_custom_call.1} parent=1 // pred_check_branch
      %24 = sbr.rel (0) target = $region13
    $region12: #{tpu_custom_call.1} parent=1 // pred_region
      %25 = dma.done [#allocation3], 128
    $region13: #{tpu_custom_call.1} parent=1 // pred_fallthru
      _
    %v26 = vld [vmem:[#allocation2] sm:$0xf]
    %v27 = vld [vmem:[#allocation2 + $0x4] sm:$0xf]
    %v28 = vunpack.c.l.bf16 %v26
    %v29 = vunpack.c.l.bf16 %v27
    %v30 = vmul.f32 %v28, %v28
    %v31 = vmul.f32 %v29, %v29
    %32 = vadd.xlane.f32.xlu0 %v30
    %v33 = vpop.xlane.xlu0 %32
    %34 = vadd.xlane.f32.xlu0 %v31
    %v35 = vpop.xlane.xlu0 %34
    %v36 = vmul.f32 %v33, 0.0078125
    %v37 = vmul.f32 %v35, 0.0078125
    %v38 = vadd.f32 %v36, 1e-06
    %v39 = vadd.f32 %v37, 1e-06
    %v40 = vrsqrt.pop %v38
    %v41 = vrsqrt.pop %v39
    %v42 = vmul.f32 %v28, %v40
    %v43 = vmul.f32 %v29, %v41
    %v44 = vld [vmem:[%s1] sm:$0x1]
    %v45 = vunpack.c.l.bf16 %v44
    %v46 = vlaneseq
    %v47 = vshrl.u32 %v46, 7
    %v48 = vsub.s32 0, %v47
    %v49 = vrot.slane %v45, %v48
    %v50 = vmul.f32 %v42, %v49
    %v51 = vmul.f32 %v43, %v49
    %v52 = vpack.c.bf16 %v51, %v50
    %v54 = vunpack.c.l.b16 %v52
    %v55 = vunpack.c.h.b16 %v52
    %v56 = vpack.c.b16 %v54, %v54
    %v57 = vpack.c.b16 %v55, %v55
    %60 = vst [vmem:[#allocation5] sm:$0xf] %v56
    %61 = vst [vmem:[#allocation5 + $0x4] sm:$0xf] %v57
    // Predicated region
    $region14: #{tpu_custom_call.1} parent=1 // pred_check
      _
    $region15: #{tpu_custom_call.1} parent=1 // pred_check_branch
      %63 = sbr.rel (0) target = $region17
    $region16: #{tpu_custom_call.1} parent=1 // pred_region
      %s65 = ssub.s32 128, 128
      %66 = vsyncadd [#allocation4], %s65
      %s67 = sshll.u32 [#allocation5], 4
      %s68 = int_to_ptr.vmem [resolvable:$true] %s67
      %73 = dma.vmem_to_hbm [thread:$0]  %s68, 128, %s2, [#allocation4], 64, 64, 4
    $region17: #{tpu_custom_call.1} parent=1 // pred_fallthru
      _
    // Predicated region
    $region18: #{tpu_custom_call.1} parent=1 // pred_check
      _
    $region19: #{tpu_custom_call.1} parent=1 // pred_check_branch
      %75 = sbr.rel (0) target = $region21
    $region20: #{tpu_custom_call.1} parent=1 // pred_region
      %76 = dma.done [#allocation4], 128
    $region21: #{tpu_custom_call.1} parent=1 // pred_fallthru
      _
    %77 = vsyncpa [#allocation3], 1
    %78 = vsyncpa [#allocation4], 1

</llo_original>
